<compile_context>
chip_gen: v5e
topology: v5e:2x2
jax: 0.10.0
libtpu: 0.0.40
codegen_flags: <defaults>
</compile_context>

<pallas_src>
import functools

import jax
import jax.numpy as jnp
from jax import lax
from jax.experimental import pallas as pl
from jax.experimental.pallas import tpu as pltpu

_BN_EPS = 1e-5


# -----------------------------------------------------------------------------
# Kernel 1: phase-batched conv matmul.
#   * whole K / whole N per block  -> no k axis, no redundant per-k stores,
#     no accumulator scratch needed (single dot per grid step).
#   * optional fused per-channel sum / sum-of-squares (BatchNorm batch stats);
#     the stats output block index is constant -> stays resident across the
#     whole grid (both axes marked "arbitrary" in that case).
#   * optional fused tanh epilogue (final layer) -> no separate lane-sparse
#     elementwise pass over the largest activation.
# -----------------------------------------------------------------------------
def _phase_mm_kernel(a_ref, w_ref, o_ref, *stats_refs, act, with_stats):
    # a_ref: (1, tm, K) bf16, w_ref: (1, K, Nc) bf16, o_ref: (1, tm, Nc) f32
    acc = jnp.dot(a_ref[0], w_ref[0], preferred_element_type=jnp.float32)
    if act == "tanh":
        o_ref[0] = jnp.tanh(acc)          # EUP slot -> effectively free here
    else:
        o_ref[0] = acc
    if with_stats:
        s_ref, ss_ref = stats_refs

        @pl.when((pl.program_id(0) == 0) & (pl.program_id(1) == 0))
        def _():
            s_ref[...] = jnp.zeros_like(s_ref)
            ss_ref[...] = jnp.zeros_like(ss_ref)

        s_ref[...] += jnp.sum(acc, axis=0, keepdims=True)
        ss_ref[...] += jnp.sum(acc * acc, axis=0, keepdims=True)


def phase_matmul_pallas(a, w, *, act=None, with_stats=False, tm=512):
    """(P, M, K) @ (P, K, Nc) -> (P, M, Nc) f32 (optionally + per-column stats)."""
    P, M, K = a.shape
    _, _, Nc = w.shape
    tm = min(tm, M)
    tm = max(8, (tm + 7) // 8 * 8)
    Mp = pl.cdiv(M, tm) * tm
    if Mp != M:
        a = jnp.pad(a, ((0, 0), (0, Mp - M), (0, 0)))   # zero rows: inert for stats
    a = a.astype(jnp.bfloat16)   # bf16 MXU inputs, f32 accumulation
    w = w.astype(jnp.bfloat16)

    grid = (P, Mp // tm)
    in_specs = [pl.BlockSpec((1, tm, K), lambda p, i: (p, i, 0)),
                pl.BlockSpec((1, K, Nc), lambda p, i: (p, 0, 0))]
    y_spec = pl.BlockSpec((1, tm, Nc), lambda p, i: (p, i, 0))
    y_shape = jax.ShapeDtypeStruct((P, Mp, Nc), jnp.float32)
    kern = functools.partial(_phase_mm_kernel, act=act, with_stats=with_stats)

    if with_stats:
        y, s, ss = pl.pallas_call(
            kern,
            out_shape=(y_shape,
                       jax.ShapeDtypeStruct((1, Nc), jnp.float32),
                       jax.ShapeDtypeStruct((1, Nc), jnp.float32)),
            grid_spec=pltpu.PrefetchScalarGridSpec(
                num_scalar_prefetch=0, grid=grid, in_specs=in_specs,
                out_specs=[y_spec,
                           pl.BlockSpec((1, Nc), lambda p, i: (0, 0)),
                           pl.BlockSpec((1, Nc), lambda p, i: (0, 0))]),
            compiler_params=pltpu.CompilerParams(
                dimension_semantics=("arbitrary", "arbitrary")),
        )(a, w)
        return y[:, :M], s, ss

    y = pl.pallas_call(
        kern,
        out_shape=y_shape,
        grid_spec=pltpu.PrefetchScalarGridSpec(
            num_scalar_prefetch=0, grid=grid, in_specs=in_specs,
            out_specs=y_spec),
        compiler_params=pltpu.CompilerParams(
            dimension_semantics=("parallel", "parallel")),
    )(a, w)
    return y[:, :M]


# -----------------------------------------------------------------------------
# Kernel 2: fused per-channel affine + activation (BatchNorm apply + ReLU).
# -----------------------------------------------------------------------------
def _affine_act_kernel(x_ref, scale_ref, shift_ref, o_ref, *, act):
    y = x_ref[...] * scale_ref[...] + shift_ref[...]
    if act == "relu":
        y = jnp.maximum(y, 0.0)
    elif act == "tanh":
        y = jnp.tanh(y)
    o_ref[...] = y


def affine_act_pallas(x, scale, shift, act="relu", tm=1024):
    M, C = x.shape
    tm = min(tm, M)
    tm = max(8, (tm + 7) // 8 * 8)
    Mp = pl.cdiv(M, tm) * tm
    if Mp != M:
        x = jnp.pad(x, ((0, Mp - M), (0, 0)))
    out = pl.pallas_call(
        functools.partial(_affine_act_kernel, act=act),
        out_shape=jax.ShapeDtypeStruct((Mp, C), jnp.float32),
        grid_spec=pltpu.PrefetchScalarGridSpec(
            num_scalar_prefetch=0, grid=(Mp // tm,),
            in_specs=[pl.BlockSpec((tm, C), lambda i: (i, 0)),
                      pl.BlockSpec((1, C), lambda i: (0, 0)),
                      pl.BlockSpec((1, C), lambda i: (0, 0))],
            out_specs=pl.BlockSpec((tm, C), lambda i: (i, 0))),
        compiler_params=pltpu.CompilerParams(dimension_semantics=("parallel",)),
    )(x.astype(jnp.float32),
      scale.reshape(1, C).astype(jnp.float32),
      shift.reshape(1, C).astype(jnp.float32))
    return out[:M]


# -----------------------------------------------------------------------------
# Stride-phase decomposition of ConvTranspose2d(k=4, stride=2, padding=1):
#   out[2m+py, 2l+px] = sum_{(dy,ky) in _TAPS[py]} sum_{(dx,kx) in _TAPS[px]}
#                         x[m+dy, l+dx] . w[:, :, ky, kx]
# Each phase is a dense (M, 4*Cin) x (4*Cin, Cout) matmul on the un-upsampled
# input. (A is still assembled in HBM, but it is dense bf16 and ~16x smaller
# than the previous 16-tap zero-inserted im2col; a fully in-kernel tap-shift
# would need element-offset BlockSpecs and is not worth it at these sizes.)
# -----------------------------------------------------------------------------
_TAPS = {0: ((0, 1), (-1, 3)), 1: ((1, 0), (0, 2))}   # (input shift, kernel tap)


def build_phase_operands(x_nhwc, w_pt, cout_pad):
    """A: (4, N*H*W, 4*Cin) bf16, W: (4, 4*Cin, cout_pad) bf16."""
    N, H, W, Cin = x_nhwc.shape
    Cout = w_pt.shape[1]
    xb = x_nhwc.astype(jnp.bfloat16)
    wb = w_pt.astype(jnp.bfloat16)
    x_pad = jnp.pad(xb, ((0, 0), (1, 1), (1, 1), (0, 0)))

    def view(dy, dx):
        return x_pad[:, 1 + dy:1 + dy + H, 1 + dx:1 + dx + W, :].reshape(N * H * W, Cin)

    a_list, w_list = [], []
    for py in (0, 1):
        for px in (0, 1):
            cols, rows = [], []
            for dy, ky in _TAPS[py]:
                for dx, kx in _TAPS[px]:
                    cols.append(view(dy, dx))
                    rows.append(wb[:, :, ky, kx])             # (Cin, Cout)
            a_list.append(jnp.concatenate(cols, axis=1))      # (M, 4*Cin)
            w_list.append(jnp.concatenate(rows, axis=0))      # (4*Cin, Cout)
    A = jnp.stack(a_list, axis=0)
    Wm = jnp.stack(w_list, axis=0)
    if cout_pad > Cout:
        Wm = jnp.pad(Wm, ((0, 0), (0, 0), (0, cout_pad - Cout)))
    return A, Wm


def interleave_phases(y, N, H, W, C):
    """y: (4, N*H*W, C) with phase p = 2*py + px  ->  (N, 2H, 2W, C) NHWC."""
    y = y.reshape(2, 2, N, H, W, C)
    return y.transpose(2, 3, 0, 4, 1, 5).reshape(N, 2 * H, 2 * W, C)


# --------------------------------- forward ------------------------------------
def generator_forward_pallas(x_nchw, params):
    N = x_nchw.shape[0]
    assert x_nchw.shape[2] == 1 and x_nchw.shape[3] == 1, "DCGAN latent is 1x1"

    # ---- layer 1: ConvTranspose2d(latent, 512, 4, 1, 0) on a 1x1 input -------
    # Only N*16 output rows: far too small to amortize a pallas_call, so the
    # matmul is plain XLA (per performance review); BN-affine+ReLU stays Pallas.
    p0 = params[0]
    w0 = p0["w"]                                               # (latent, 512, 4, 4)
    c0 = w0.shape[1]
    h2 = jnp.einsum("nc,cohw->nhwo", x_nchw[:, :, 0, 0], w0).reshape(N * 16, c0)
    mean = jnp.mean(h2, axis=0, keepdims=True)
    var = jnp.var(h2, axis=0, keepdims=True)                   # biased (BN training)
    scale = p0["gamma"].reshape(1, c0) * lax.rsqrt(var + _BN_EPS)
    shift = p0["beta"].reshape(1, c0) - mean * scale
    h = affine_act_pallas(h2, scale, shift, act="relu").reshape(N, 4, 4, c0)

    # ---- layers 2..5: stride-2 transposed convs as phase-batched matmuls -----
    n_layers = len(params)
    for li in range(1, n_layers):
        p = params[li]
        w = p["w"]
        cout = w.shape[1]
        H, W = h.shape[1], h.shape[2]
        M = N * H * W
        is_last = li == n_layers - 1
        # lane-dense output for the final layer (Cout=3 -> 128)
        cout_pad = pl.cdiv(cout, 128) * 128 if is_last else cout
        A, Wm = build_phase_operands(h, w, cout_pad)

        if is_last:
            y = phase_matmul_pallas(A, Wm, act="tanh")          # tanh fused in epilogue
            h = interleave_phases(y[..., :cout], N, H, W, cout)
        else:
            y, s, ss = phase_matmul_pallas(A, Wm, with_stats=True)
            cnt = 4.0 * M                                       # elements per channel
            mean = s / cnt
            var = ss / cnt - mean * mean                        # biased var (BN training)
            scale = p["gamma"].reshape(1, cout) * lax.rsqrt(var + _BN_EPS)
            shift = p["beta"].reshape(1, cout) - mean * scale
            h_act = affine_act_pallas(y.reshape(4 * M, cout), scale, shift, act="relu")
            h = interleave_phases(h_act.reshape(4, M, cout), N, H, W, cout)

    # TODO(synk): BatchNorm running-stats buffer updates (train-time bookkeeping
    # only) are not materialized; they do not affect the forward output.
    return jnp.transpose(h, (0, 3, 1, 2))                       # back to NCHW


# ------------------------------ pure-JAX reference -----------------------------
_CFGS = [(1, 0), (2, 1), (2, 1), (2, 1), (2, 1)]   # (stride, padding) per layer


def generator_forward_ref(x_nchw, params):
    h = x_nchw
    for p, (stride, pad) in zip(params, _CFGS):
        w = p["w"]
        k = w.shape[2]
        rhs = jnp.flip(w, (2, 3)).transpose(1, 0, 2, 3)          # (Cout, Cin, k, k)
        h = lax.conv_general_dilated(
            h, rhs, window_strides=(1, 1),
            padding=[(k - 1 - pad, k - 1 - pad)] * 2,
            lhs_dilation=(stride, stride),
            dimension_numbers=("NCHW", "OIHW", "NCHW"))
        if p["gamma"] is not None:
            mean = jnp.mean(h, axis=(0, 2, 3), keepdims=True)
            var = jnp.var(h, axis=(0, 2, 3), keepdims=True)
            h = (h - mean) / jnp.sqrt(var + _BN_EPS)
            h = h * p["gamma"].reshape(1, -1, 1, 1) + p["beta"].reshape(1, -1, 1, 1)
            h = jnp.maximum(h, 0.0)
        else:
            h = jnp.tanh(h)
    return h


# ---------------------------------- parameters ---------------------------------
def init_params(key, latent_dim=100, channels=3):
    cins = [latent_dim, 512, 256, 128, 64]
    couts = [512, 256, 128, 64, channels]
    params = []
    for li, (cin, cout) in enumerate(zip(cins, couts)):
        key, wk = jax.random.split(key)
        w = (jax.random.normal(wk, (cin, cout, 4, 4), jnp.float32)
             / jnp.sqrt(cin * 16.0))
        has_bn = li < len(cins) - 1
        params.append({
            "w": w,
            "gamma": jnp.ones((cout,), jnp.float32) if has_bn else None,
            "beta": jnp.zeros((cout,), jnp.float32) if has_bn else None,
        })
    return params


if __name__ == "__main__":
    latent_dim, channels, batch = 100, 3, 2
    key = jax.random.PRNGKey(0)
    pkey, xkey = jax.random.split(key)
    params = init_params(pkey, latent_dim, channels)
    x = jax.random.normal(xkey, (batch, latent_dim, 1, 1), jnp.float32)

    out = jax.block_until_ready(generator_forward_pallas(x, params))
    ref = jax.block_until_ready(generator_forward_ref(x, params))

    assert out.shape == (batch, channels, 64, 64), out.shape
    # bf16 MXU inputs (per perf review) vs an f32 reference; tanh output in (-1, 1).
    max_err = float(jnp.max(jnp.abs(out - ref)))
    assert jnp.allclose(out, ref, atol=3e-2, rtol=3e-2), max_err
    print("KERNEL_OK")
</pallas_src>

<mosaic_0001>
module attributes {stable_mosaic.version = 11 : i64} {
  func.func @_affine_act_kernel(%arg0: i32, %arg1: memref<32x512xf32, #tpu.memory_space<vmem>>, %arg2: memref<1x512xf32, #tpu.memory_space<vmem>>, %arg3: memref<1x512xf32, #tpu.memory_space<vmem>>, %arg4: memref<32x512xf32, #tpu.memory_space<vmem>>) attributes {dimension_semantics = [#tpu.dimension_semantics<parallel>], iteration_bounds = array<i64: 1>, scalar_prefetch = 0 : i64, scratch_operands = 0 : i64, tpu.core_type = #tpu.core_type<tc>, window_params = [{transform_indices = @transform_0, window_bounds = array<i64: 32, 512>}, {pipeline_mode = #tpu.pipeline_mode<synchronous>, transform_indices = @transform_1, window_bounds = array<i64: 1, 512>}, {pipeline_mode = #tpu.pipeline_mode<synchronous>, transform_indices = @transform_2, window_bounds = array<i64: 1, 512>}, {transform_indices = @transform_3, window_bounds = array<i64: 32, 512>}]} {
    %c0 = arith.constant 0 : index
    %c0_0 = arith.constant 0 : index
    %0 = vector.load %arg1[%c0, %c0_0] : memref<32x512xf32, #tpu.memory_space<vmem>>, vector<32x512xf32>
    %c0_1 = arith.constant 0 : index
    %c0_2 = arith.constant 0 : index
    %1 = vector.load %arg2[%c0_1, %c0_2] : memref<1x512xf32, #tpu.memory_space<vmem>>, vector<1x512xf32>
    %2 = vector.broadcast %1 : vector<1x512xf32> to vector<32x512xf32>
    %3 = arith.mulf %0, %2 : vector<32x512xf32>
    %c0_3 = arith.constant 0 : index
    %c0_4 = arith.constant 0 : index
    %4 = vector.load %arg3[%c0_3, %c0_4] : memref<1x512xf32, #tpu.memory_space<vmem>>, vector<1x512xf32>
    %5 = vector.broadcast %4 : vector<1x512xf32> to vector<32x512xf32>
    %6 = arith.addf %3, %5 : vector<32x512xf32>
    %cst = arith.constant 0.000000e+00 : f32
    %7 = vector.broadcast %cst : f32 to vector<32x512xf32>
    %8 = arith.maximumf %6, %7 : vector<32x512xf32>
    %c0_5 = arith.constant 0 : index
    %c0_6 = arith.constant 0 : index
    %9 = vector.load %arg4[%c0_5, %c0_6] : memref<32x512xf32, #tpu.memory_space<vmem>>, vector<32x512xf32>
    tpu.vector_store %arg4[%c0_5, %c0_6], %8 {strides = array<i32>} : memref<32x512xf32, #tpu.memory_space<vmem>>, vector<32x512xf32>,
    return
  }
  func.func @transform_0(%arg0: i32) -> (i32, i32) {
    %c0_i32 = arith.constant 0 : i32
    %c0_i32_0 = arith.constant 0 : i32
    return %arg0, %c0_i32 : i32, i32
  }
  func.func @transform_1(%arg0: i32) -> (i32, i32) {
    %c0_i32 = arith.constant 0 : i32
    %c0_i32_0 = arith.constant 0 : i32
    %c0_i32_1 = arith.constant 0 : i32
    return %c0_i32, %c0_i32_0 : i32, i32
  }
  func.func @transform_2(%arg0: i32) -> (i32, i32) {
    %c0_i32 = arith.constant 0 : i32
    %c0_i32_0 = arith.constant 0 : i32
    %c0_i32_1 = arith.constant 0 : i32
    return %c0_i32, %c0_i32_0 : i32, i32
  }
  func.func @transform_3(%arg0: i32) -> (i32, i32) {
    %c0_i32 = arith.constant 0 : i32
    %c0_i32_0 = arith.constant 0 : i32
    return %arg0, %c0_i32 : i32, i32
  }
}

</mosaic_0001>

<llo_original>
// kernel: tpu_custom_call.1
$region0: #{tpu_custom_call.1}
  #allocation0 [shape = 'u32[]', space=smem, size = 0x4, offset = 0x4, fixed_abs, tag = 'smem constant byte address 0x4 - core index']
  #allocation1 [shape = 'u32[72,128]{1,0:T(1,128)}', space=vmem, size = 0x9000, scoped, tag = 'internal scratch']
  %s0 = inlined_call_operand.hbm [shape: f32[32,512], index: 0, kind: input, shape index: {}]
  %s1 = inlined_call_operand.hbm [shape: f32[1,512], index: 1, kind: input, shape index: {}]
  %s2 = inlined_call_operand.hbm [shape: f32[1,512], index: 2, kind: input, shape index: {}]
  %s3 = inlined_call_operand.hbm [shape: f32[32,512], index: 3, kind: output, shape index: {}]
  %s4 = sld [smem:[#allocation0]]
  $region34: #{tpu_custom_call.1} parent=0
    _
  %s6 = ssub.s32 1, %s4
  %s7 = scalar_select 0, %s6, %s4
  $region1: #{tpu_custom_call.1} parent=0
    #allocation2 [shape = 'u8[65536]{0}', space=vmem, size = 0x10000, scoped, tag = 'input window, operand 0, single buffered']
    #allocation3 [shape = 's32[1]{0}', space=sflag, size = 0x4, scoped, tag = 'scoped memory for tpu_custom_call.1']
    #allocation4 [shape = 's32[1]{0}', space=sflag, size = 0x4, scoped, tag = 'scoped memory for tpu_custom_call.1']
    #allocation5 [shape = 'u8[2048]{0}', space=vmem, size = 0x800, scoped, tag = 'input window, operand 1, single buffered']
    #allocation6 [shape = 's32[1]{0}', space=sflag, size = 0x4, scoped, tag = 'scoped memory for tpu_custom_call.1']
    #allocation7 [shape = 'u8[2048]{0}', space=vmem, size = 0x800, scoped, tag = 'input window, operand 2, single buffered']
    #allocation8 [shape = 'u8[65536]{0}', space=vmem, size = 0x10000, scoped, tag = 'output window, operand 0, single buffered']
    %8 = vsyncpa [#allocation3], 0
    %9 = vsyncpa [#allocation6], 0
    %10 = vsyncpa [#allocation4], 0
    // Predicated region
    $region2: #{tpu_custom_call.1} parent=1 // pred_check
      _
    $region3: #{tpu_custom_call.1} parent=1 // pred_check_branch
      %12 = sbr.rel (0) target = $region5
    $region4: #{tpu_custom_call.1} parent=1 // pred_region
      %14 = vsyncadd [#allocation3], 0
      %s15 = sshll.u32 %s0, 4
      %s16 = int_to_ptr.hbm [resolvable:$true] %s15
      %s17 = sshll.u32 [#allocation2], 4
      %s18 = int_to_ptr.vmem [resolvable:$true] %s17
      %23 = dma.hbm_to_vmem [thread:$0]  %s16, 2048, %s18, [#allocation3], 512, 512, 32
    $region5: #{tpu_custom_call.1} parent=1 // pred_fallthru
      _
    // Predicated region
    $region6: #{tpu_custom_call.1} parent=1 // pred_check
      _
    $region7: #{tpu_custom_call.1} parent=1 // pred_check_branch
      %25 = sbr.rel (0) target = $region9
    $region8: #{tpu_custom_call.1} parent=1 // pred_region
      %27 = vsyncadd [#allocation6], 0
      %s29 = sshll.u32 %s1, 4
      %s30 = int_to_ptr.hbm [resolvable:$true] %s29
      %s31 = sshll.u32 [#allocation5], 4
      %s32 = int_to_ptr.vmem [resolvable:$true] %s31
      %34 = dma.hbm_to_vmem [thread:$0]  %s30, 64, %s32, [#allocation6]
    $region9: #{tpu_custom_call.1} parent=1 // pred_fallthru
      _
    // Predicated region
    $region10: #{tpu_custom_call.1} parent=1 // pred_check
      _
    $region11: #{tpu_custom_call.1} parent=1 // pred_check_branch
      %36 = sbr.rel (0) target = $region13
    $region12: #{tpu_custom_call.1} parent=1 // pred_region
      %38 = vsyncadd [#allocation6], 0
      %s40 = sshll.u32 %s2, 4
      %s41 = int_to_ptr.hbm [resolvable:$true] %s40
      %s42 = sshll.u32 [#allocation7], 4
      %s43 = int_to_ptr.vmem [resolvable:$true] %s42
      %45 = dma.hbm_to_vmem [thread:$0]  %s41, 64, %s43, [#allocation6]
    $region13: #{tpu_custom_call.1} parent=1 // pred_fallthru
      _
    // Predicated region
    $region14: #{tpu_custom_call.1} parent=1 // pred_check
      _
    $region15: #{tpu_custom_call.1} parent=1 // pred_check_branch
      %47 = sbr.rel (0) target = $region17
    $region16: #{tpu_custom_call.1} parent=1 // pred_region
      %49 = dma.done [#allocation3], 2048
    $region17: #{tpu_custom_call.1} parent=1 // pred_fallthru
      _
    // Predicated region
    $region18: #{tpu_custom_call.1} parent=1 // pred_check
      _
    $region19: #{tpu_custom_call.1} parent=1 // pred_check_branch
      %51 = sbr.rel (0) target = $region21
    $region20: #{tpu_custom_call.1} parent=1 // pred_region
      %53 = dma.done [#allocation6], 64
    $region21: #{tpu_custom_call.1} parent=1 // pred_fallthru
      _
    // Predicated region
    $region22: #{tpu_custom_call.1} parent=1 // pred_check
      _
    $region23: #{tpu_custom_call.1} parent=1 // pred_check_branch
      %55 = sbr.rel (0) target = $region25
    $region24: #{tpu_custom_call.1} parent=1 // pred_region
      %57 = dma.done [#allocation6], 64
    $region25: #{tpu_custom_call.1} parent=1 // pred_fallthru
      _
    %v58 = vld [vmem:[#allocation2] sm:$0xff]
    %v59 = vld [vmem:[#allocation2 + $0x8] sm:$0xff]
    %v60 = vld [vmem:[#allocation2 + $0x10] sm:$0xff]
    %v61 = vld [vmem:[#allocation2 + $0x18] sm:$0xff]
    %v62 = vld [vmem:[#allocation2 + $0x20] sm:$0xff]
    %v63 = vld [vmem:[#allocation2 + $0x28] sm:$0xff]
    %v64 = vld [vmem:[#allocation2 + $0x30] sm:$0xff]
    %v65 = vld [vmem:[#allocation2 + $0x38] sm:$0xff]
    %v66 = vld [vmem:[#allocation2 + $0x40] sm:$0xff]
    %v67 = vld [vmem:[#allocation2 + $0x48] sm:$0xff]
    %v68 = vld [vmem:[#allocation2 + $0x50] sm:$0xff]
    %v69 = vld [vmem:[#allocation2 + $0x58] sm:$0xff]
    %v70 = vld [vmem:[#allocation2 + $0x60] sm:$0xff]
    %v71 = vld [vmem:[#allocation2 + $0x68] sm:$0xff]
    %v72 = vld [vmem:[#allocation2 + $0x70] sm:$0xff]
    %v73 = vld [vmem:[#allocation2 + $0x78] sm:$0xff]
    %v74 = vld [vmem:[#allocation5] sm:$0xf]
    %v76 = vperm.slane %v74, 0
    %v77 = vperm.slane %v74, 1
    %v78 = vperm.slane %v74, 2
    %v79 = vperm.slane %v74, 3
    %v84 = vmul.f32 %v58, %v76
    %v85 = vmul.f32 %v59, %v77
    %v86 = vmul.f32 %v60, %v78
    %v87 = vmul.f32 %v61, %v79
    %v88 = vmul.f32 %v62, %v76
    %v89 = vmul.f32 %v63, %v77
    %v90 = vmul.f32 %v64, %v78
    %v91 = vmul.f32 %v65, %v79
    %v92 = vmul.f32 %v66, %v76
    %v93 = vmul.f32 %v67, %v77
    %v94 = vmul.f32 %v68, %v78
    %v95 = vmul.f32 %v69, %v79
    %v96 = vmul.f32 %v70, %v76
    %v97 = vmul.f32 %v71, %v77
    %v98 = vmul.f32 %v72, %v78
    %v99 = vmul.f32 %v73, %v79
    %v100 = vld [vmem:[#allocation7] sm:$0xf]
    %v102 = vperm.slane %v100, 0
    %v103 = vperm.slane %v100, 1
    %v104 = vperm.slane %v100, 2
    %v105 = vperm.slane %v100, 3
    %v110 = vadd.f32 %v84, %v102
    %v111 = vadd.f32 %v85, %v103
    %v112 = vadd.f32 %v86, %v104
    %v113 = vadd.f32 %v87, %v105
    %v114 = vadd.f32 %v88, %v102
    %v115 = vadd.f32 %v89, %v103
    %v116 = vadd.f32 %v90, %v104
    %v117 = vadd.f32 %v91, %v105
    %v118 = vadd.f32 %v92, %v102
    %v119 = vadd.f32 %v93, %v103
    %v120 = vadd.f32 %v94, %v104
    %v121 = vadd.f32 %v95, %v105
    %v122 = vadd.f32 %v96, %v102
    %v123 = vadd.f32 %v97, %v103
    %v124 = vadd.f32 %v98, %v104
    %v125 = vadd.f32 %v99, %v105
    %v126 = vmax.f32 %v110, 0.0
    %v127 = vmax.f32 %v111, 0.0
    %v128 = vmax.f32 %v112, 0.0
    %v129 = vmax.f32 %v113, 0.0
    %v130 = vmax.f32 %v114, 0.0
    %v131 = vmax.f32 %v115, 0.0
    %v132 = vmax.f32 %v116, 0.0
    %v133 = vmax.f32 %v117, 0.0
    %v134 = vmax.f32 %v118, 0.0
    %v135 = vmax.f32 %v119, 0.0
    %v136 = vmax.f32 %v120, 0.0
    %v137 = vmax.f32 %v121, 0.0
    %v138 = vmax.f32 %v122, 0.0
    %v139 = vmax.f32 %v123, 0.0
    %v140 = vmax.f32 %v124, 0.0
    %v141 = vmax.f32 %v125, 0.0
    %142 = vst [vmem:[#allocation8] sm:$0xff] %v126
    %143 = vst [vmem:[#allocation8 + $0x8] sm:$0xff] %v127
    %144 = vst [vmem:[#allocation8 + $0x10] sm:$0xff] %v128
    %145 = vst [vmem:[#allocation8 + $0x18] sm:$0xff] %v129
    %146 = vst [vmem:[#allocation8 + $0x20] sm:$0xff] %v130
    %147 = vst [vmem:[#allocation8 + $0x28] sm:$0xff] %v131
    %148 = vst [vmem:[#allocation8 + $0x30] sm:$0xff] %v132
    %149 = vst [vmem:[#allocation8 + $0x38] sm:$0xff] %v133
    %150 = vst [vmem:[#allocation8 + $0x40] sm:$0xff] %v134
    %151 = vst [vmem:[#allocation8 + $0x48] sm:$0xff] %v135
    %152 = vst [vmem:[#allocation8 + $0x50] sm:$0xff] %v136
    %153 = vst [vmem:[#allocation8 + $0x58] sm:$0xff] %v137
    %154 = vst [vmem:[#allocation8 + $0x60] sm:$0xff] %v138
    %155 = vst [vmem:[#allocation8 + $0x68] sm:$0xff] %v139
    %156 = vst [vmem:[#allocation8 + $0x70] sm:$0xff] %v140
    %157 = vst [vmem:[#allocation8 + $0x78] sm:$0xff] %v141
    // Predicated region
    $region26: #{tpu_custom_call.1} parent=1 // pred_check
      _
    $region27: #{tpu_custom_call.1} parent=1 // pred_check_branch
      %159 = sbr.rel (0) target = $region29
    $region28: #{tpu_custom_call.1} parent=1 // pred_region
      %161 = vsyncadd [#allocation4], 0
      %s162 = sshll.u32 [#allocation8], 4
      %s163 = int_to_ptr.vmem [resolvable:$true] %s162
      %s164 = sshll.u32 %s3, 4
      %s165 = int_to_ptr.hbm [resolvable:$true] %s164
      %170 = dma.vmem_to_hbm [thread:$0]  %s163, 2048, %s165, [#allocation4], 512, 512, 32
    $region29: #{tpu_custom_call.1} parent=1 // pred_fallthru
      _
    // Predicated region
    $region30: #{tpu_custom_call.1} parent=1 // pred_check
      _
    $region31: #{tpu_custom_call.1} parent=1 // pred_check_branch
      %172 = sbr.rel (0) target = $region33
    $region32: #{tpu_custom_call.1} parent=1 // pred_region
      %174 = dma.done [#allocation4], 2048
    $region33: #{tpu_custom_call.1} parent=1 // pred_fallthru
      _
    %175 = vsyncpa [#allocation3], 1
    %176 = vsyncpa [#allocation6], 1
    %177 = vsyncpa [#allocation4], 1

</llo_original>
